<compile_context>
chip_gen: v7x
topology: tpu7x:2x2x1
jax: 0.10.0
libtpu: 0.0.40
codegen_flags: <defaults>
</compile_context>

<pallas_src>
import functools

import jax
import jax.numpy as jnp
from jax.experimental import pallas as pl
from jax.experimental.pallas import tpu as pltpu

LANE = 128  # TPU lane width; hidden/output feature dims are padded to this.


def _round_up(d, m=LANE):
    return ((d + m - 1) // m) * m


def _pad_axis(a, axis, target):
    pad = target - a.shape[axis]
    if pad <= 0:
        return a
    widths = [(0, 0)] * a.ndim
    widths[axis] = (0, pad)
    return jnp.pad(a, widths)


# ----------------------------------------------------------------------------
# Fused Pallas kernel: EdgeModel MLP + scatter-sum + NodeModel MLP
# ----------------------------------------------------------------------------
def fused_meta_kernel(src_col_ref, dst_col_ref,            # indices (E,1)
                      x_ref, ea_ref, f_ref,                # features (bf16)
                      ew1_ref, ew2_ref,                    # edge MLP (W;b) fused
                      nw1_ref, nw2_ref,                    # node MLP (W;b) fused
                      new_ea_ref, new_x_ref,               # outputs (f32)
                      *, f_x, f_e, f_f, hep, hnp, fep):
    x_bf = x_ref[...]                                      # (N, F_X)  bf16
    ea_bf = ea_ref[...]                                    # (E, F_E)  bf16
    f_bf = f_ref[...]                                      # (N, F_F)  bf16
    n_nodes = x_bf.shape[0]
    n_edges = ea_bf.shape[0]

    # ---- in-kernel gather of x[src], x[dest] as one-hot matmuls (MXU) ----
    # One-hot 0/1 entries are exact in bf16; gather result is exact since each
    # output row selects exactly one bf16 row.
    # TODO(synk): DMA-side gather (scalar prefetch + pl.Element) at real sizes.
    node_ids = jax.lax.broadcasted_iota(jnp.int32, (n_edges, n_nodes), 1)
    gather_src = (node_ids == src_col_ref[...]).astype(jnp.bfloat16)   # (E, N)
    gather_dst = (node_ids == dst_col_ref[...]).astype(jnp.bfloat16)   # (E, N)
    x_src = jnp.dot(gather_src, x_bf,
                    preferred_element_type=jnp.float32).astype(jnp.bfloat16)
    x_dst = jnp.dot(gather_dst, x_bf,
                    preferred_element_type=jnp.float32).astype(jnp.bfloat16)

    # ---- EdgeModel: static sublane-aligned slices of the fused (W1; b1) ----
    w1s = ew1_ref[0:f_x, :]
    w1d = ew1_ref[f_x:2 * f_x, :]
    w1e = ew1_ref[2 * f_x:2 * f_x + f_e, :]
    eb1 = ew1_ref[2 * f_x + f_e:2 * f_x + f_e + 1, :].astype(jnp.float32)
    h_e = (jnp.dot(x_src, w1s, preferred_element_type=jnp.float32)
           + jnp.dot(x_dst, w1d, preferred_element_type=jnp.float32)
           + jnp.dot(ea_bf, w1e, preferred_element_type=jnp.float32)
           + eb1)
    h_e = jnp.maximum(h_e, 0.0)                            # f32 VPU (v5e-safe)

    ew2 = ew2_ref[0:hep, :]
    eb2 = ew2_ref[hep:hep + 1, :].astype(jnp.float32)
    new_ea = (jnp.dot(h_e.astype(jnp.bfloat16), ew2,
                      preferred_element_type=jnp.float32) + eb2)   # (E, fep) f32
    new_ea_ref[...] = new_ea                               # lane-dense store

    # ---- scatter-sum by dest: reuse gather_dst transposed (no 2nd one-hot) ----
    # agg[n, c] = sum_e gather_dst[e, n] * new_ea[e, c]
    # TODO(synk): tiled 'arbitrary' edge-axis segment reduction for large E/N.
    agg = jax.lax.dot_general(
        gather_dst, new_ea.astype(jnp.bfloat16),
        dimension_numbers=(((0,), (0,)), ((), ())),
        preferred_element_type=jnp.float32)                # (N, fep) f32

    # ---- NodeModel: static slices of the fused (W1; b1) ----
    nw1x = nw1_ref[0:f_x, :]
    nw1a = nw1_ref[f_x:f_x + fep, :]
    nw1f = nw1_ref[f_x + fep:f_x + fep + f_f, :]
    nb1 = nw1_ref[f_x + fep + f_f:f_x + fep + f_f + 1, :].astype(jnp.float32)
    h_n = (jnp.dot(x_bf, nw1x, preferred_element_type=jnp.float32)
           + jnp.dot(agg.astype(jnp.bfloat16), nw1a,
                     preferred_element_type=jnp.float32)
           + jnp.dot(f_bf, nw1f, preferred_element_type=jnp.float32)
           + nb1)
    h_n = jnp.maximum(h_n, 0.0)

    nw2 = nw2_ref[0:hnp, :]
    nb2 = nw2_ref[hnp:hnp + 1, :].astype(jnp.float32)
    new_x_ref[...] = (jnp.dot(h_n.astype(jnp.bfloat16), nw2,
                              preferred_element_type=jnp.float32) + nb2)


# ----------------------------------------------------------------------------
# Wrapper: parameter fusing/padding + pallas_call plumbing
# ----------------------------------------------------------------------------
_VMEM = functools.partial(pl.BlockSpec, memory_space=pltpu.MemorySpace.VMEM)


def meta_layer(x, edge_index, edge_attr, f, edge_params, node_params):
    """Forward pass matching MetaLayer.forward semantics (single fused kernel)."""
    n, f_x = x.shape
    e, f_e = edge_attr.shape
    f_f = f.shape[1]
    h_e_dim = edge_params["w1"].shape[1]
    h_n_dim = node_params["w1"].shape[1]
    f_e_out = edge_params["w2"].shape[1]
    f_x_out = node_params["w2"].shape[1]

    hep = _round_up(h_e_dim)      # padded edge hidden dim
    hnp = _round_up(h_n_dim)      # padded node hidden dim
    fep = _round_up(f_e_out)      # padded edge-output dim (kernel-internal)
    fxp = _round_up(f_x_out)      # padded node-output dim (kernel-internal)

    # --- ONE fused (W; b) operand per MLP layer, lane-padded, bf16 for MXU ---
    # Row layout of ew1: [x_src (f_x) | x_dst (f_x) | edge_attr (f_e) | bias (1)]
    ew1 = jnp.concatenate([edge_params["w1"],
                           edge_params["b1"].reshape(1, -1)], axis=0)
    ew1 = _pad_axis(ew1, 1, hep).astype(jnp.bfloat16)            # (2F_X+F_E+1, hep)
    ew2 = jnp.concatenate([_pad_axis(edge_params["w2"], 0, hep),
                           edge_params["b2"].reshape(1, -1)], axis=0)
    ew2 = _pad_axis(ew2, 1, fep).astype(jnp.bfloat16)            # (hep+1, fep)

    # Row layout of nw1: [x (f_x) | agg (fep, zero-padded from f_e_out) | f (f_f) | bias (1)]
    nw1_full = node_params["w1"]
    nw1 = jnp.concatenate([nw1_full[:f_x],
                           _pad_axis(nw1_full[f_x:f_x + f_e_out], 0, fep),
                           nw1_full[f_x + f_e_out:],
                           node_params["b1"].reshape(1, -1)], axis=0)
    nw1 = _pad_axis(nw1, 1, hnp).astype(jnp.bfloat16)            # (F_X+fep+F_F+1, hnp)
    nw2 = jnp.concatenate([_pad_axis(node_params["w2"], 0, hnp),
                           node_params["b2"].reshape(1, -1)], axis=0)
    nw2 = _pad_axis(nw2, 1, fxp).astype(jnp.bfloat16)            # (hnp+1, fxp)

    # --- inputs: bf16 features (halves DMA bytes), int32 index columns ---
    x_bf = x.astype(jnp.bfloat16)
    ea_bf = edge_attr.astype(jnp.bfloat16)
    f_bf = f.astype(jnp.bfloat16)
    src_col = edge_index[0].astype(jnp.int32).reshape(e, 1)
    dst_col = edge_index[1].astype(jnp.int32).reshape(e, 1)

    kernel = functools.partial(fused_meta_kernel,
                               f_x=f_x, f_e=f_e, f_f=f_f,
                               hep=hep, hnp=hnp, fep=fep)

    new_ea_pad, new_x_pad = pl.pallas_call(
        kernel,
        out_shape=(jax.ShapeDtypeStruct((e, fep), jnp.float32),
                   jax.ShapeDtypeStruct((n, fxp), jnp.float32)),
        in_specs=[_VMEM()] * 9,
        out_specs=(_VMEM(), _VMEM()),
    )(src_col, dst_col, x_bf, ea_bf, f_bf, ew1, ew2, nw1, nw2)

    # slice padded lane dims back to the model's true output widths
    return new_x_pad[:, :f_x_out], new_ea_pad[:, :f_e_out]


# ----------------------------------------------------------------------------
# Pure-JAX f32 reference for correctness checking
# ----------------------------------------------------------------------------
def meta_layer_ref(x, edge_index, edge_attr, f, ep, np_):
    src, dest = edge_index[0], edge_index[1]
    e_in = jnp.concatenate([x[src], x[dest], edge_attr], axis=-1)
    h = jnp.maximum(e_in @ ep["w1"] + ep["b1"], 0.0)
    new_ea = h @ ep["w2"] + ep["b2"]
    agg = jax.ops.segment_sum(new_ea, dest, num_segments=x.shape[0])
    n_in = jnp.concatenate([x, agg, f], axis=-1)
    h = jnp.maximum(n_in @ np_["w1"] + np_["b1"], 0.0)
    new_x = h @ np_["w2"] + np_["b2"]
    return new_x, new_ea


# ----------------------------------------------------------------------------
# Main
# ----------------------------------------------------------------------------
if __name__ == "__main__":
    key = jax.random.PRNGKey(0)
    ks = jax.random.split(key, 12)

    N = 16          # nodes
    E = 32          # edges
    F_X = 16        # node feature dim
    F_E = 16        # edge feature dim
    F_F = 8         # global/extra per-node feature dim
    H = 32          # hidden dim
    F_E_OUT = 16    # edge-model output dim
    F_X_OUT = 16    # node-model output dim

    # Inputs
    x = jax.random.normal(ks[0], (N, F_X), jnp.float32)
    edge_attr = jax.random.normal(ks[1], (E, F_E), jnp.float32)
    f = jax.random.normal(ks[2], (N, F_F), jnp.float32)
    src = jax.random.randint(ks[3], (E,), 0, N, jnp.int32)
    dest = jax.random.randint(ks[4], (E,), 0, N, jnp.int32)
    edge_index = jnp.stack([src, dest], axis=0)   # (2, E)

    # Deterministic parameters (synthetic init, no checkpoint load)
    def dense(k, fan_in, fan_out):
        return jax.random.normal(k, (fan_in, fan_out), jnp.float32) * (fan_in ** -0.5)

    edge_params = {
        "w1": dense(ks[5], 2 * F_X + F_E, H),
        "b1": jnp.zeros((1, H), jnp.float32),
        "w2": dense(ks[6], H, F_E_OUT),
        "b2": jnp.zeros((1, F_E_OUT), jnp.float32),
    }
    node_params = {
        "w1": dense(ks[7], F_X + F_E_OUT + F_F, H),
        "b1": jnp.zeros((1, H), jnp.float32),
        "w2": dense(ks[8], H, F_X_OUT),
        "b2": jnp.zeros((1, F_X_OUT), jnp.float32),
    }

    meta_fn = jax.jit(meta_layer)
    new_x, new_ea = meta_fn(x, edge_index, edge_attr, f,
                            edge_params, node_params)
    jax.block_until_ready((new_x, new_ea))

    ref_x, ref_ea = meta_layer_ref(x, edge_index, edge_attr, f,
                                   edge_params, node_params)
    # Kernel uses bf16 MXU operands with f32 accumulation; compare against the
    # f32 reference with tolerances that cover bf16 input rounding.
    assert jnp.allclose(new_ea, ref_ea, atol=1e-1, rtol=1e-1), \
        f"edge_attr mismatch, max err {jnp.max(jnp.abs(new_ea - ref_ea))}"
    assert jnp.allclose(new_x, ref_x, atol=1e-1, rtol=1e-1), \
        f"x mismatch, max err {jnp.max(jnp.abs(new_x - ref_x))}"

    print("KERNEL_OK")
</pallas_src>

<mosaic_0001>
module attributes {stable_mosaic.version = 11 : i64} {
  func.func @fused_meta_kernel(%arg0: memref<32x1xi32, #tpu.memory_space<vmem>>, %arg1: memref<32x1xi32, #tpu.memory_space<vmem>>, %arg2: memref<16x16xbf16, #tpu.memory_space<vmem>>, %arg3: memref<32x16xbf16, #tpu.memory_space<vmem>>, %arg4: memref<16x8xbf16, #tpu.memory_space<vmem>>, %arg5: memref<49x128xbf16, #tpu.memory_space<vmem>>, %arg6: memref<129x128xbf16, #tpu.memory_space<vmem>>, %arg7: memref<153x128xbf16, #tpu.memory_space<vmem>>, %arg8: memref<129x128xbf16, #tpu.memory_space<vmem>>, %arg9: memref<32x128xf32, #tpu.memory_space<vmem>>, %arg10: memref<16x128xf32, #tpu.memory_space<vmem>>) attributes {dimension_semantics = [], scalar_prefetch = 0 : i64, scratch_operands = 0 : i64, tpu.core_type = #tpu.core_type<tc>} {
    %c0 = arith.constant 0 : index
    %c0_0 = arith.constant 0 : index
    %0 = vector.load %arg2[%c0, %c0_0] : memref<16x16xbf16, #tpu.memory_space<vmem>>, vector<16x16xbf16>
    %c0_1 = arith.constant 0 : index
    %c0_2 = arith.constant 0 : index
    %1 = vector.load %arg3[%c0_1, %c0_2] : memref<32x16xbf16, #tpu.memory_space<vmem>>, vector<32x16xbf16>
    %c0_3 = arith.constant 0 : index
    %c0_4 = arith.constant 0 : index
    %2 = vector.load %arg4[%c0_3, %c0_4] : memref<16x8xbf16, #tpu.memory_space<vmem>>, vector<16x8xbf16>
    %3 = tpu.iota {dimensions = array<i32: 1>} : vector<32x16xi32>
    %c0_5 = arith.constant 0 : index
    %c0_6 = arith.constant 0 : index
    %4 = vector.load %arg0[%c0_5, %c0_6] : memref<32x1xi32, #tpu.memory_space<vmem>>, vector<32x1xi32>
    %5 = vector.broadcast %4 : vector<32x1xi32> to vector<32x16xi32>
    %6 = arith.cmpi eq, %3, %5 : vector<32x16xi32>
    %7 = arith.extui %6 : vector<32x16xi1> to vector<32x16xi32>
    %8 = arith.sitofp %7 : vector<32x16xi32> to vector<32x16xf32>
    %9 = arith.truncf %8 : vector<32x16xf32> to vector<32x16xbf16>
    %c0_7 = arith.constant 0 : index
    %c0_8 = arith.constant 0 : index
    %10 = vector.load %arg1[%c0_7, %c0_8] : memref<32x1xi32, #tpu.memory_space<vmem>>, vector<32x1xi32>
    %11 = vector.broadcast %10 : vector<32x1xi32> to vector<32x16xi32>
    %12 = arith.cmpi eq, %3, %11 : vector<32x16xi32>
    %13 = arith.extui %12 : vector<32x16xi1> to vector<32x16xi32>
    %14 = arith.sitofp %13 : vector<32x16xi32> to vector<32x16xf32>
    %15 = arith.truncf %14 : vector<32x16xf32> to vector<32x16xbf16>
    %cst = arith.constant dense<0.000000e+00> : vector<32x16xf32>
    %16 = tpu.matmul %9, %0, %cst {dimension_numbers = #tpu.dot_dimension_numbers<[1], [0], [0], [1], [0, 0, 1, 1], [], []>} : vector<32x16xbf16>, vector<16x16xbf16>, vector<32x16xf32> -> vector<32x16xf32>
    %17 = arith.truncf %16 : vector<32x16xf32> to vector<32x16xbf16>
    %cst_9 = arith.constant dense<0.000000e+00> : vector<32x16xf32>
    %18 = tpu.matmul %15, %0, %cst_9 {dimension_numbers = #tpu.dot_dimension_numbers<[1], [0], [0], [1], [0, 0, 1, 1], [], []>} : vector<32x16xbf16>, vector<16x16xbf16>, vector<32x16xf32> -> vector<32x16xf32>
    %19 = arith.truncf %18 : vector<32x16xf32> to vector<32x16xbf16>
    %c0_10 = arith.constant 0 : index
    %c0_11 = arith.constant 0 : index
    %20 = vector.load %arg5[%c0_10, %c0_11] : memref<49x128xbf16, #tpu.memory_space<vmem>>, vector<16x128xbf16>
    %c16 = arith.constant 16 : index
    %c0_12 = arith.constant 0 : index
    %21 = vector.load %arg5[%c16, %c0_12] : memref<49x128xbf16, #tpu.memory_space<vmem>>, vector<16x128xbf16>
    %c32 = arith.constant 32 : index
    %c0_13 = arith.constant 0 : index
    %22 = vector.load %arg5[%c32, %c0_13] : memref<49x128xbf16, #tpu.memory_space<vmem>>, vector<16x128xbf16>
    %c48 = arith.constant 48 : index
    %c0_14 = arith.constant 0 : index
    %23 = vector.load %arg5[%c48, %c0_14] : memref<49x128xbf16, #tpu.memory_space<vmem>>, vector<1x128xbf16>
    %24 = arith.extf %23 : vector<1x128xbf16> to vector<1x128xf32>
    %cst_15 = arith.constant dense<0.000000e+00> : vector<32x128xf32>
    %25 = tpu.matmul %17, %20, %cst_15 {dimension_numbers = #tpu.dot_dimension_numbers<[1], [0], [0], [1], [0, 0, 1, 1], [], []>} : vector<32x16xbf16>, vector<16x128xbf16>, vector<32x128xf32> -> vector<32x128xf32>
    %cst_16 = arith.constant dense<0.000000e+00> : vector<32x128xf32>
    %26 = tpu.matmul %19, %21, %cst_16 {dimension_numbers = #tpu.dot_dimension_numbers<[1], [0], [0], [1], [0, 0, 1, 1], [], []>} : vector<32x16xbf16>, vector<16x128xbf16>, vector<32x128xf32> -> vector<32x128xf32>
    %27 = arith.addf %25, %26 : vector<32x128xf32>
    %cst_17 = arith.constant dense<0.000000e+00> : vector<32x128xf32>
    %28 = tpu.matmul %1, %22, %cst_17 {dimension_numbers = #tpu.dot_dimension_numbers<[1], [0], [0], [1], [0, 0, 1, 1], [], []>} : vector<32x16xbf16>, vector<16x128xbf16>, vector<32x128xf32> -> vector<32x128xf32>
    %29 = arith.addf %27, %28 : vector<32x128xf32>
    %30 = vector.broadcast %24 : vector<1x128xf32> to vector<32x128xf32>
    %31 = arith.addf %29, %30 : vector<32x128xf32>
    %cst_18 = arith.constant 0.000000e+00 : f32
    %32 = vector.broadcast %cst_18 : f32 to vector<32x128xf32>
    %33 = arith.maximumf %31, %32 : vector<32x128xf32>
    %c0_19 = arith.constant 0 : index
    %c0_20 = arith.constant 0 : index
    %34 = vector.load %arg6[%c0_19, %c0_20] : memref<129x128xbf16, #tpu.memory_space<vmem>>, vector<128x128xbf16>
    %c128 = arith.constant 128 : index
    %c0_21 = arith.constant 0 : index
    %35 = vector.load %arg6[%c128, %c0_21] : memref<129x128xbf16, #tpu.memory_space<vmem>>, vector<1x128xbf16>
    %36 = arith.extf %35 : vector<1x128xbf16> to vector<1x128xf32>
    %37 = arith.truncf %33 : vector<32x128xf32> to vector<32x128xbf16>
    %cst_22 = arith.constant dense<0.000000e+00> : vector<32x128xf32>
    %38 = tpu.matmul %37, %34, %cst_22 {dimension_numbers = #tpu.dot_dimension_numbers<[1], [0], [0], [1], [0, 0, 1, 1], [], []>} : vector<32x128xbf16>, vector<128x128xbf16>, vector<32x128xf32> -> vector<32x128xf32>
    %39 = vector.broadcast %36 : vector<1x128xf32> to vector<32x128xf32>
    %40 = arith.addf %38, %39 : vector<32x128xf32>
    %c0_23 = arith.constant 0 : index
    %c0_24 = arith.constant 0 : index
    %41 = vector.load %arg9[%c0_23, %c0_24] : memref<32x128xf32, #tpu.memory_space<vmem>>, vector<32x128xf32>
    tpu.vector_store %arg9[%c0_23, %c0_24], %40 {strides = array<i32>} : memref<32x128xf32, #tpu.memory_space<vmem>>, vector<32x128xf32>,
    %42 = arith.truncf %40 : vector<32x128xf32> to vector<32x128xbf16>
    %cst_25 = arith.constant dense<0.000000e+00> : vector<16x128xf32>
    %43 = tpu.matmul %15, %42, %cst_25 {dimension_numbers = #tpu.dot_dimension_numbers<[0], [0], [1], [1], [0, 1, 1, 1], [], []>} : vector<32x16xbf16>, vector<32x128xbf16>, vector<16x128xf32> -> vector<16x128xf32>
    %c0_26 = arith.constant 0 : index
    %c0_27 = arith.constant 0 : index
    %44 = vector.load %arg7[%c0_26, %c0_27] : memref<153x128xbf16, #tpu.memory_space<vmem>>, vector<16x128xbf16>
    %c16_28 = arith.constant 16 : index
    %c0_29 = arith.constant 0 : index
    %45 = vector.load %arg7[%c16_28, %c0_29] : memref<153x128xbf16, #tpu.memory_space<vmem>>, vector<128x128xbf16>
    %c144 = arith.constant 144 : index
    %c0_30 = arith.constant 0 : index
    %46 = vector.load %arg7[%c144, %c0_30] : memref<153x128xbf16, #tpu.memory_space<vmem>>, vector<8x128xbf16>
    %c152 = arith.constant 152 : index
    %c0_31 = arith.constant 0 : index
    %47 = vector.load %arg7[%c152, %c0_31] : memref<153x128xbf16, #tpu.memory_space<vmem>>, vector<1x128xbf16>
    %48 = arith.extf %47 : vector<1x128xbf16> to vector<1x128xf32>
    %cst_32 = arith.constant dense<0.000000e+00> : vector<16x128xf32>
    %49 = tpu.matmul %0, %44, %cst_32 {dimension_numbers = #tpu.dot_dimension_numbers<[1], [0], [0], [1], [0, 0, 1, 1], [], []>} : vector<16x16xbf16>, vector<16x128xbf16>, vector<16x128xf32> -> vector<16x128xf32>
    %50 = arith.truncf %43 : vector<16x128xf32> to vector<16x128xbf16>
    %cst_33 = arith.constant dense<0.000000e+00> : vector<16x128xf32>
    %51 = tpu.matmul %50, %45, %cst_33 {dimension_numbers = #tpu.dot_dimension_numbers<[1], [0], [0], [1], [0, 0, 1, 1], [], []>} : vector<16x128xbf16>, vector<128x128xbf16>, vector<16x128xf32> -> vector<16x128xf32>
    %52 = arith.addf %49, %51 : vector<16x128xf32>
    %cst_34 = arith.constant dense<0.000000e+00> : vector<16x128xf32>
    %53 = tpu.matmul %2, %46, %cst_34 {dimension_numbers = #tpu.dot_dimension_numbers<[1], [0], [0], [1], [0, 0, 1, 1], [], []>} : vector<16x8xbf16>, vector<8x128xbf16>, vector<16x128xf32> -> vector<16x128xf32>
    %54 = arith.addf %52, %53 : vector<16x128xf32>
    %55 = vector.broadcast %48 : vector<1x128xf32> to vector<16x128xf32>
    %56 = arith.addf %54, %55 : vector<16x128xf32>
    %cst_35 = arith.constant 0.000000e+00 : f32
    %57 = vector.broadcast %cst_35 : f32 to vector<16x128xf32>
    %58 = arith.maximumf %56, %57 : vector<16x128xf32>
    %c0_36 = arith.constant 0 : index
    %c0_37 = arith.constant 0 : index
    %59 = vector.load %arg8[%c0_36, %c0_37] : memref<129x128xbf16, #tpu.memory_space<vmem>>, vector<128x128xbf16>
    %c128_38 = arith.constant 128 : index
    %c0_39 = arith.constant 0 : index
    %60 = vector.load %arg8[%c128_38, %c0_39] : memref<129x128xbf16, #tpu.memory_space<vmem>>, vector<1x128xbf16>
    %61 = arith.extf %60 : vector<1x128xbf16> to vector<1x128xf32>
    %62 = arith.truncf %58 : vector<16x128xf32> to vector<16x128xbf16>
    %cst_40 = arith.constant dense<0.000000e+00> : vector<16x128xf32>
    %63 = tpu.matmul %62, %59, %cst_40 {dimension_numbers = #tpu.dot_dimension_numbers<[1], [0], [0], [1], [0, 0, 1, 1], [], []>} : vector<16x128xbf16>, vector<128x128xbf16>, vector<16x128xf32> -> vector<16x128xf32>
    %64 = vector.broadcast %61 : vector<1x128xf32> to vector<16x128xf32>
    %65 = arith.addf %63, %64 : vector<16x128xf32>
    %c0_41 = arith.constant 0 : index
    %c0_42 = arith.constant 0 : index
    %66 = vector.load %arg10[%c0_41, %c0_42] : memref<16x128xf32, #tpu.memory_space<vmem>>, vector<16x128xf32>
    tpu.vector_store %arg10[%c0_41, %c0_42], %65 {strides = array<i32>} : memref<16x128xf32, #tpu.memory_space<vmem>>, vector<16x128xf32>,
    return
  }
}

</mosaic_0001>

<llo_original>
// kernel: meta_layer.1
$region0: #{meta_layer.1}
  #allocation0 [shape = 'u32[]', space=smem, size = 0x4, offset = 0x4, fixed_abs, tag = 'smem constant byte address 0x4 - core index']
  #allocation1 [shape = 'u32[144,128]{1,0:T(1,128)}', space=vmem, size = 0x12000, scoped, tag = 'internal scratch']
  %s0 = inlined_call_operand.vmem [shape: s32[32,1], index: 0, kind: input, shape index: {}]
  %s1 = inlined_call_operand.vmem [shape: s32[32,1], index: 1, kind: input, shape index: {}]
  %s2 = inlined_call_operand.vmem [shape: bf16[16,16], index: 2, kind: input, shape index: {}]
  %s3 = inlined_call_operand.vmem [shape: bf16[32,16], index: 3, kind: input, shape index: {}]
  %s4 = inlined_call_operand.vmem [shape: bf16[16,8], index: 4, kind: input, shape index: {}]
  %s5 = inlined_call_operand.vmem [shape: bf16[49,128], index: 5, kind: input, shape index: {}]
  %s6 = inlined_call_operand.vmem [shape: bf16[129,128], index: 6, kind: input, shape index: {}]
  %s7 = inlined_call_operand.vmem [shape: bf16[153,128], index: 7, kind: input, shape index: {}]
  %s8 = inlined_call_operand.vmem [shape: bf16[129,128], index: 8, kind: input, shape index: {}]
  %s9 = inlined_call_operand.vmem [shape: f32[32,128], index: 9, kind: output, shape index: {0}]
  %s10 = inlined_call_operand.hbm [shape: f32[16,128], index: 10, kind: output, shape index: {1}]
  %11 = xla_tuple %s9, %s10
  %s12 = sld [smem:[#allocation0]]
  $region54: #{meta_layer.1} parent=0
    _
  %s14 = ssub.s32 1, %s12
  %s15 = scalar_select 0, %s14, %s12
  $region1: #{meta_layer.1} parent=0
    #allocation2 [shape = 'u8[8192]{0}', space=vmem, size = 0x2000, scoped, tag = 'output window, operand 1, single buffered']
    #allocation3 [shape = 's32[1]{0}', space=sflag, size = 0x4, scoped, tag = 'scoped memory for meta_layer.1']
    %16 = vsyncpa [#allocation3], 0
    // Predicated region
    $region2: #{meta_layer.1} parent=1 // pred_check
      _
    $region3: #{meta_layer.1} parent=1 // pred_check_branch
      %18 = sbr.rel (0) target = $region5
    $region4: #{meta_layer.1} parent=1 // pred_region
      _
    $region5: #{meta_layer.1} parent=1 // pred_fallthru
      _
    // Predicated region
    $region6: #{meta_layer.1} parent=1 // pred_check
      _
    $region7: #{meta_layer.1} parent=1 // pred_check_branch
      %20 = sbr.rel (0) target = $region9
    $region8: #{meta_layer.1} parent=1 // pred_region
      _
    $region9: #{meta_layer.1} parent=1 // pred_fallthru
      _
    // Predicated region
    $region10: #{meta_layer.1} parent=1 // pred_check
      _
    $region11: #{meta_layer.1} parent=1 // pred_check_branch
      %22 = sbr.rel (0) target = $region13
    $region12: #{meta_layer.1} parent=1 // pred_region
      _
    $region13: #{meta_layer.1} parent=1 // pred_fallthru
      _
    // Predicated region
    $region14: #{meta_layer.1} parent=1 // pred_check
      _
    $region15: #{meta_layer.1} parent=1 // pred_check_branch
      %24 = sbr.rel (0) target = $region17
    $region16: #{meta_layer.1} parent=1 // pred_region
      _
    $region17: #{meta_layer.1} parent=1 // pred_fallthru
      _
    // Predicated region
    $region18: #{meta_layer.1} parent=1 // pred_check
      _
    $region19: #{meta_layer.1} parent=1 // pred_check_branch
      %26 = sbr.rel (0) target = $region21
    $region20: #{meta_layer.1} parent=1 // pred_region
      _
    $region21: #{meta_layer.1} parent=1 // pred_fallthru
      _
    // Predicated region
    $region22: #{meta_layer.1} parent=1 // pred_check
      _
    $region23: #{meta_layer.1} parent=1 // pred_check_branch
      %28 = sbr.rel (0) target = $region25
    $region24: #{meta_layer.1} parent=1 // pred_region
      _
    $region25: #{meta_layer.1} parent=1 // pred_fallthru
      _
    // Predicated region
    $region26: #{meta_layer.1} parent=1 // pred_check
      _
    $region27: #{meta_layer.1} parent=1 // pred_check_branch
      %30 = sbr.rel (0) target = $region29
    $region28: #{meta_layer.1} parent=1 // pred_region
      _
    $region29: #{meta_layer.1} parent=1 // pred_fallthru
      _
    // Predicated region
    $region30: #{meta_layer.1} parent=1 // pred_check
      _
    $region31: #{meta_layer.1} parent=1 // pred_check_branch
      %32 = sbr.rel (0) target = $region33
    $region32: #{meta_layer.1} parent=1 // pred_region
      _
    $region33: #{meta_layer.1} parent=1 // pred_fallthru
      _
    // Predicated region
    $region34: #{meta_layer.1} parent=1 // pred_check
      _
    $region35: #{meta_layer.1} parent=1 // pred_check_branch
      %34 = sbr.rel (0) target = $region37
    $region36: #{meta_layer.1} parent=1 // pred_region
      _
    $region37: #{meta_layer.1} parent=1 // pred_fallthru
      _
    %v36 = vld [vmem:[%s2] sm:$0xf]
    %v37 = vld [vmem:[%s2 + $0x4] sm:$0xf]
    %v38 = vld [vmem:[%s3] sm:$0xf]
    %v39 = vld [vmem:[%s3 + $0x4] sm:$0xf]
    %v40 = vld [vmem:[%s3 + $0x8] sm:$0xf]
    %v41 = vld [vmem:[%s3 + $0xc] sm:$0xf]
    %v42 = vld [vmem:[%s4] sm:$0xf]
    %v43 = vld [vmem:[%s4 + $0x4] sm:$0xf]
    %v44 = vlaneseq
    %v45 = vand.u32 %v44, 127
    %v46 = vld [vmem:[%s0] sm:$0xff]
    %v47 = vld [vmem:[%s0 + $0x8] sm:$0xff]
    %v48 = vld [vmem:[%s0 + $0x10] sm:$0xff]
    %v49 = vld [vmem:[%s0 + $0x18] sm:$0xff]
    %50 = vset.pattern.permute.xlu0 0
    %51 = vperm.xlu0 %50, %v46
    %v52 = vpop.permute.xlu0 %51
    %53 = vset.pattern.permute.xlu0 0
    %54 = vperm.xlu0 %53, %v47
    %v55 = vpop.permute.xlu0 %54
    %56 = vset.pattern.permute.xlu0 0
    %57 = vperm.xlu0 %56, %v48
    %v58 = vpop.permute.xlu0 %57
    %59 = vset.pattern.permute.xlu0 0
    %60 = vperm.xlu0 %59, %v49
    %v61 = vpop.permute.xlu0 %60
    %vm62 = vcmp.eq.s32.totalorder %v45, %v52
    %vm63 = vcmp.eq.s32.totalorder %v45, %v55
    %vm64 = vcmp.eq.s32.totalorder %v45, %v58
    %vm65 = vcmp.eq.s32.totalorder %v45, %v61
    %v66 = vsel %vm62, 1, 0
    %v67 = vsel %vm63, 1, 0
    %v68 = vsel %vm64, 1, 0
    %v69 = vsel %vm65, 1, 0
    %v70 = vcvt.s32.f32 %v66
    %v71 = vcvt.s32.f32 %v67
    %v72 = vcvt.s32.f32 %v68
    %v73 = vcvt.s32.f32 %v69
    %v74 = vpack.c.bf16 %v71, %v70
    %v75 = vpack.c.bf16 %v73, %v72
    %v76 = vld [vmem:[%s1] sm:$0xff]
    %v77 = vld [vmem:[%s1 + $0x8] sm:$0xff]
    %v78 = vld [vmem:[%s1 + $0x10] sm:$0xff]
    %v79 = vld [vmem:[%s1 + $0x18] sm:$0xff]
    %80 = vset.pattern.permute.xlu0 0
    %81 = vperm.xlu0 %80, %v76
    %v82 = vpop.permute.xlu0 %81
    %83 = vset.pattern.permute.xlu0 0
    %84 = vperm.xlu0 %83, %v77
    %v85 = vpop.permute.xlu0 %84
    %86 = vset.pattern.permute.xlu0 0
    %87 = vperm.xlu0 %86, %v78
    %v88 = vpop.permute.xlu0 %87
    %89 = vset.pattern.permute.xlu0 0
    %90 = vperm.xlu0 %89, %v79
    %v91 = vpop.permute.xlu0 %90
    %vm92 = vcmp.eq.s32.totalorder %v45, %v82
    %vm93 = vcmp.eq.s32.totalorder %v45, %v85
    %vm94 = vcmp.eq.s32.totalorder %v45, %v88
    %vm95 = vcmp.eq.s32.totalorder %v45, %v91
    %v96 = vsel %vm92, 1, 0
    %v97 = vsel %vm93, 1, 0
    %v98 = vsel %vm94, 1, 0
    %v99 = vsel %vm95, 1, 0
    %v100 = vcvt.s32.f32 %v96
    %v101 = vcvt.s32.f32 %v97
    %v102 = vcvt.s32.f32 %v98
    %v103 = vcvt.s32.f32 %v99
    %v104 = vpack.c.bf16 %v101, %v100
    %v105 = vpack.c.bf16 %v103, %v102
    %v108 = vunpack.c.l.b16 %v36
    %v109 = vunpack.c.l.b16 %v37
    %v110 = vpack.c.b16 %v109, %v108
    %vm112 = vcmask 130048
    %v114 = vsel %vm112, %v74, 0
    %v117 = vsel %vm112, %v75, 0
    %119 = vmatprep.subr.bf16.mxu0 0
    %120 = vmatpush1.bf16.msra.mxu0 %v110
    %121 = vmatprep.subr.bf16.mxu0 0
    %122 = vmatpush1.bf16.msra.mxu0 0
    %123 = vmatprep.subr.bf16.mxu0 0
    %124 = vmatpush1.bf16.msra.mxu0 0
    %125 = vmatprep.subr.bf16.mxu0 0
    %126 = vmatpush1.bf16.msra.mxu0 0
    %127 = vmatprep.subr.bf16.mxu0 0
    %128 = vmatpush1.bf16.msra.mxu0 0
    %129 = vmatprep.subr.bf16.mxu0 0
    %130 = vmatpush1.bf16.msra.mxu0 0
    %131 = vmatprep.subr.bf16.mxu0 0
    %132 = vmatpush1.bf16.msra.mxu0 0
    %133 = vmatprep.subr.bf16.mxu0 0
    %134 = vmatpush1.bf16.msra.mxu0 0
    %135 = vmatprep.subr.bf16.mxu0 0
    %136 = vmatpush1.bf16.msra.mxu0 0
    %137 = vmatprep.subr.bf16.mxu0 0
    %138 = vmatpush1.bf16.msra.mxu0 0
    %139 = vmatprep.subr.bf16.mxu0 0
    %140 = vmatpush1.bf16.msra.mxu0 0
    %141 = vmatprep.subr.bf16.mxu0 0
    %142 = vmatpush1.bf16.msra.mxu0 0
    %143 = vmatprep.subr.bf16.mxu0 0
    %144 = vmatpush1.bf16.msra.mxu0 0
    %145 = vmatprep.subr.bf16.mxu0 0
    %146 = vmatpush1.bf16.msra.mxu0 0
    %147 = vmatprep.subr.bf16.mxu0 0
    %148 = vmatpush1.bf16.msra.mxu0 0
    %149 = vmatprep.subr.bf16.mxu0 0
    %150 = vmatpush1.bf16.msra.mxu0 0
    %151 = vmatprep.mubr.bf16.mxu0 0
    %152 = vmatmul.mubr.bf16.gmra.mrb[0].mxu0 %v114
    %v153 = vpop.f32.mrb[0].mxu0
    %v154 = vadd.f32 0.0, %v153
    %v155 = vpop.f32.mrb[0].mxu0
    %v156 = vpop.f32.mrb[0].mxu0
    %v157 = vadd.f32 0.0, %v156
    %v158 = vpop.f32.mrb[0].mxu0
    %159 = vmatprep.mubr.bf16.mxu0 0
    %160 = vmatmul.mubr.bf16.gmra.mrb[0].mxu0 %v117
    %v161 = vpop.f32.mrb[0].mxu0
    %v162 = vadd.f32 0.0, %v161
    %v163 = vpop.f32.mrb[0].mxu0
    %v164 = vpop.f32.mrb[0].mxu0
    %v165 = vadd.f32 0.0, %v164
    %v166 = vpop.f32.mrb[0].mxu0
    %167 = vdwg.mxu0
    %v168 = vpack.c.bf16 %v157, %v154
    %v169 = vpack.c.bf16 %v165, %v162
    %v171 = vsel %vm112, %v104, 0
    %v174 = vsel %vm112, %v105, 0
    %176 = vmatprep.subr.bf16.mxu0 0
    %177 = vmatpush1.bf16.msra.mxu0 %v110
    %178 = vmatprep.subr.bf16.mxu0 0
    %179 = vmatpush1.bf16.msra.mxu0 0
    %180 = vmatprep.subr.bf16.mxu0 0
    %181 = vmatpush1.bf16.msra.mxu0 0
    %182 = vmatprep.subr.bf16.mxu0 0
    %183 = vmatpush1.bf16.msra.mxu0 0
    %184 = vmatprep.subr.bf16.mxu0 0
    %185 = vmatpush1.bf16.msra.mxu0 0
    %186 = vmatprep.subr.bf16.mxu0 0
    %187 = vmatpush1.bf16.msra.mxu0 0
    %188 = vmatprep.subr.bf16.mxu0 0
    %189 = vmatpush1.bf16.msra.mxu0 0
    %190 = vmatprep.subr.bf16.mxu0 0
    %191 = vmatpush1.bf16.msra.mxu0 0
    %192 = vmatprep.subr.bf16.mxu0 0
    %193 = vmatpush1.bf16.msra.mxu0 0
    %194 = vmatprep.subr.bf16.mxu0 0
    %195 = vmatpush1.bf16.msra.mxu0 0
    %196 = vmatprep.subr.bf16.mxu0 0
    %197 = vmatpush1.bf16.msra.mxu0 0
    %198 = vmatprep.subr.bf16.mxu0 0
    %199 = vmatpush1.bf16.msra.mxu0 0
    %200 = vmatprep.subr.bf16.mxu0 0
    %201 = vmatpush1.bf16.msra.mxu0 0
    %202 = vmatprep.subr.bf16.mxu0 0
    %203 = vmatpush1.bf16.msra.mxu0 0
    %204 = vmatprep.subr.bf16.mxu0 0
    %205 = vmatpush1.bf16.msra.mxu0 0
    %206 = vmatprep.subr.bf16.mxu0 0
    %207 = vmatpush1.bf16.msra.mxu0 0
    %208 = vmatprep.mubr.bf16.mxu0 0
    %209 = vmatmul.mubr.bf16.gmra.mrb[0].mxu0 %v171
    %v210 = vpop.f32.mrb[0].mxu0
    %v211 = vadd.f32 0.0, %v210
    %v212 = vpop.f32.mrb[0].mxu0
    %v213 = vpop.f32.mrb[0].mxu0
    %v214 = vadd.f32 0.0, %v213
    %v215 = vpop.f32.mrb[0].mxu0
    %216 = vmatprep.mubr.bf16.mxu0 0
    %217 = vmatmul.mubr.bf16.gmra.mrb[0].mxu0 %v174
    %v218 = vpop.f32.mrb[0].mxu0
    %v219 = vadd.f32 0.0, %v218
    %v220 = vpop.f32.mrb[0].mxu0
    %v221 = vpop.f32.mrb[0].mxu0
    %v222 = vadd.f32 0.0, %v221
    %v223 = vpop.f32.mrb[0].mxu0
    %224 = vdwg.mxu0
    %v225 = vpack.c.bf16 %v214, %v211
    %v226 = vpack.c.bf16 %v222, %v219
    %v227 = vld [vmem:[%s5] sm:$0xf]
    %v228 = vld [vmem:[%s5 + $0x4] sm:$0xf]
    %v229 = vld [vmem:[%s5 + $0x8] sm:$0xf]
    %v230 = vld [vmem:[%s5 + $0xc] sm:$0xf]
    %v231 = vld [vmem:[%s5 + $0x10] sm:$0xf]
    %v232 = vld [vmem:[%s5 + $0x14] sm:$0xf]
    %v233 = vld [vmem:[%s5 + $0x18] sm:$0x1]
    %v234 = vunpack.c.l.bf16 %v233
    %v237 = vunpack.c.l.b16 %v229
    %v238 = vunpack.c.l.b16 %v230
    %v239 = vpack.c.b16 %v238, %v237
    %v242 = vsel %vm112, %v225, 0
    %v245 = vsel %vm112, %v226, 0
    %247 = vmatprep.subr.bf16.mxu0 0
    %248 = vmatpush1.bf16.msra.mxu0 %v239
    %249 = vmatprep.subr.bf16.mxu0 0
    %250 = vmatpush1.bf16.msra.mxu0 0
    %251 = vmatprep.subr.bf16.mxu0 0
    %252 = vmatpush1.bf16.msra.mxu0 0
    %253 = vmatprep.subr.bf16.mxu0 0
    %254 = vmatpush1.bf16.msra.mxu0 0
    %255 = vmatprep.subr.bf16.mxu0 0
    %256 = vmatpush1.bf16.msra.mxu0 0
    %257 = vmatprep.subr.bf16.mxu0 0
    %258 = vmatpush1.bf16.msra.mxu0 0
    %259 = vmatprep.subr.bf16.mxu0 0
    %260 = vmatpush1.bf16.msra.mxu0 0
    %261 = vmatprep.subr.bf16.mxu0 0
    %262 = vmatpush1.bf16.msra.mxu0 0
    %263 = vmatprep.subr.bf16.mxu0 0
    %264 = vmatpush1.bf16.msra.mxu0 0
    %265 = vmatprep.subr.bf16.mxu0 0
    %266 = vmatpush1.bf16.msra.mxu0 0
    %267 = vmatprep.subr.bf16.mxu0 0
    %268 = vmatpush1.bf16.msra.mxu0 0
    %269 = vmatprep.subr.bf16.mxu0 0
    %270 = vmatpush1.bf16.msra.mxu0 0
    %271 = vmatprep.subr.bf16.mxu0 0
    %272 = vmatpush1.bf16.msra.mxu0 0
    %273 = vmatprep.subr.bf16.mxu0 0
    %274 = vmatpush1.bf16.msra.mxu0 0
    %275 = vmatprep.subr.bf16.mxu0 0
    %276 = vmatpush1.bf16.msra.mxu0 0
    %277 = vmatprep.subr.bf16.mxu0 0
    %278 = vmatpush1.bf16.msra.mxu0 0
    %279 = vmatprep.mubr.bf16.mxu0 0
    %280 = vmatmul.mubr.bf16.gmra.mrb[0].mxu0 %v242
    %v281 = vpop.f32.mrb[0].mxu0
    %v282 = vadd.f32 0.0, %v281
    %v283 = vpop.f32.mrb[0].mxu0
    %v284 = vpop.f32.mrb[0].mxu0
    %v285 = vadd.f32 0.0, %v284
    %v286 = vpop.f32.mrb[0].mxu0
    %287 = vmatprep.mubr.bf16.mxu0 0
    %288 = vmatmul.mubr.bf16.gmra.mrb[0].mxu0 %v245
    %v289 = vpop.f32.mrb[0].mxu0
    %v290 = vadd.f32 0.0, %v289
    %v291 = vpop.f32.mrb[0].mxu0
    %v292 = vpop.f32.mrb[0].mxu0
    %v293 = vadd.f32 0.0, %v292
    %v294 = vpop.f32.mrb[0].mxu0
    %295 = vdwg.mxu0
    %v298 = vunpack.c.l.b16 %v227
    %v299 = vunpack.c.l.b16 %v228
    %v300 = vpack.c.b16 %v299, %v298
    %v303 = vsel %vm112, %v168, 0
    %v306 = vsel %vm112, %v169, 0
    %308 = vmatprep.subr.bf16.mxu0 0
    %309 = vmatpush1.bf16.msra.mxu0 %v300
    %310 = vmatprep.subr.bf16.mxu0 0
    %311 = vmatpush1.bf16.msra.mxu0 0
    %312 = vmatprep.subr.bf16.mxu0 0
    %313 = vmatpush1.bf16.msra.mxu0 0
    %314 = vmatprep.subr.bf16.mxu0 0
    %315 = vmatpush1.bf16.msra.mxu0 0
    %316 = vmatprep.subr.bf16.mxu0 0
    %317 = vmatpush1.bf16.msra.mxu0 0
    %318 = vmatprep.subr.bf16.mxu0 0
    %319 = vmatpush1.bf16.msra.mxu0 0
    %320 = vmatprep.subr.bf16.mxu0 0
    %321 = vmatpush1.bf16.msra.mxu0 0
    %322 = vmatprep.subr.bf16.mxu0 0
    %323 = vmatpush1.bf16.msra.mxu0 0
    %324 = vmatprep.subr.bf16.mxu0 0
    %325 = vmatpush1.bf16.msra.mxu0 0
    %326 = vmatprep.subr.bf16.mxu0 0
    %327 = vmatpush1.bf16.msra.mxu0 0
    %328 = vmatprep.subr.bf16.mxu0 0
    %329 = vmatpush1.bf16.msra.mxu0 0
    %330 = vmatprep.subr.bf16.mxu0 0
    %331 = vmatpush1.bf16.msra.mxu0 0
    %332 = vmatprep.subr.bf16.mxu0 0
    %333 = vmatpush1.bf16.msra.mxu0 0
    %334 = vmatprep.subr.bf16.mxu0 0
    %335 = vmatpush1.bf16.msra.mxu0 0
    %336 = vmatprep.subr.bf16.mxu0 0
    %337 = vmatpush1.bf16.msra.mxu0 0
    %338 = vmatprep.subr.bf16.mxu0 0
    %339 = vmatpush1.bf16.msra.mxu0 0
    %340 = vmatprep.mubr.bf16.mxu0 0
    %341 = vmatmul.mubr.bf16.gmra.mrb[0].mxu0 %v303
    %v342 = vpop.f32.mrb[0].mxu0
    %v343 = vadd.f32 %v282, %v342
    %v344 = vpop.f32.mrb[0].mxu0
    %v345 = vpop.f32.mrb[0].mxu0
    %v346 = vadd.f32 %v285, %v345
    %v347 = vpop.f32.mrb[0].mxu0
    %348 = vmatprep.mubr.bf16.mxu0 0
    %349 = vmatmul.mubr.bf16.gmra.mrb[0].mxu0 %v306
    %v350 = vpop.f32.mrb[0].mxu0
    %v351 = vadd.f32 %v290, %v350
    %v352 = vpop.f32.mrb[0].mxu0
    %v353 = vpop.f32.mrb[0].mxu0
    %v354 = vadd.f32 %v293, %v353
    %v355 = vpop.f32.mrb[0].mxu0
    %356 = vdwg.mxu0
    %v361 = vunpack.c.l.b16 %v38
    %v362 = vunpack.c.l.b16 %v39
    %v363 = vunpack.c.l.b16 %v40
    %v364 = vunpack.c.l.b16 %v41
    %v365 = vpack.c.b16 %v362, %v361
    %v366 = vpack.c.b16 %v364, %v363
    %v369 = vunpack.c.l.b16 %v231
    %v370 = vunpack.c.l.b16 %v232
    %v371 = vpack.c.b16 %v370, %v369
    %v374 = vsel %vm112, %v365, 0
    %v377 = vsel %vm112, %v366, 0
    %379 = vmatprep.subr.bf16.mxu0 0
    %380 = vmatpush1.bf16.msra.mxu0 %v371
    %381 = vmatprep.subr.bf16.mxu0 0
    %382 = vmatpush1.bf16.msra.mxu0 0
    %383 = vmatprep.subr.bf16.mxu0 0
    %384 = vmatpush1.bf16.msra.mxu0 0
    %385 = vmatprep.subr.bf16.mxu0 0
    %386 = vmatpush1.bf16.msra.mxu0 0
    %387 = vmatprep.subr.bf16.mxu0 0
    %388 = vmatpush1.bf16.msra.mxu0 0
    %389 = vmatprep.subr.bf16.mxu0 0
    %390 = vmatpush1.bf16.msra.mxu0 0
    %391 = vmatprep.subr.bf16.mxu0 0
    %392 = vmatpush1.bf16.msra.mxu0 0
    %393 = vmatprep.subr.bf16.mxu0 0
    %394 = vmatpush1.bf16.msra.mxu0 0
    %395 = vmatprep.subr.bf16.mxu0 0
    %396 = vmatpush1.bf16.msra.mxu0 0
    %397 = vmatprep.subr.bf16.mxu0 0
    %398 = vmatpush1.bf16.msra.mxu0 0
    %399 = vmatprep.subr.bf16.mxu0 0
    %400 = vmatpush1.bf16.msra.mxu0 0
    %401 = vmatprep.subr.bf16.mxu0 0
    %402 = vmatpush1.bf16.msra.mxu0 0
    %403 = vmatprep.subr.bf16.mxu0 0
    %404 = vmatpush1.bf16.msra.mxu0 0
    %405 = vmatprep.subr.bf16.mxu0 0
    %406 = vmatpush1.bf16.msra.mxu0 0
    %407 = vmatprep.subr.bf16.mxu0 0
    %408 = vmatpush1.bf16.msra.mxu0 0
    %409 = vmatprep.subr.bf16.mxu0 0
    %410 = vmatpush1.bf16.msra.mxu0 0
    %411 = vmatprep.mubr.bf16.mxu0 0
    %412 = vmatmul.mubr.bf16.gmra.mrb[0].mxu0 %v374
    %v413 = vpop.f32.mrb[0].mxu0
    %v414 = vadd.f32 0.0, %v413
    %v415 = vpop.f32.mrb[0].mxu0
    %v416 = vpop.f32.mrb[0].mxu0
    %v417 = vadd.f32 0.0, %v416
    %v418 = vpop.f32.mrb[0].mxu0
    %419 = vmatprep.mubr.bf16.mxu0 0
    %420 = vmatmul.mubr.bf16.gmra.mrb[0].mxu0 %v377
    %v421 = vpop.f32.mrb[0].mxu0
    %v422 = vadd.f32 0.0, %v421
    %v423 = vpop.f32.mrb[0].mxu0
    %v424 = vpop.f32.mrb[0].mxu0
    %v425 = vadd.f32 0.0, %v424
    %v426 = vpop.f32.mrb[0].mxu0
    %427 = vdwg.mxu0
    %v428 = vadd.f32 %v343, %v414
    %v429 = vadd.f32 %v346, %v417
    %v430 = vadd.f32 %v351, %v422
    %v431 = vadd.f32 %v354, %v425
    %v432 = vlaneseq
    %v433 = vshrl.u32 %v432, 7
    %v434 = vsub.s32 0, %v433
    %v435 = vrot.slane %v234, %v434
    %v436 = vadd.f32 %v428, %v435
    %v437 = vadd.f32 %v429, %v435
    %v438 = vadd.f32 %v430, %v435
    %v439 = vadd.f32 %v431, %v435
    %v440 = vmax.f32 %v436, 0.0
    %v441 = vmax.f32 %v437, 0.0
    %v442 = vmax.f32 %v438, 0.0
    %v443 = vmax.f32 %v439, 0.0
    %v444 = vld [vmem:[%s6] sm:$0xf]
    %v445 = vld [vmem:[%s6 + $0x4] sm:$0xf]
    %v446 = vld [vmem:[%s6 + $0x8] sm:$0xf]
    %v447 = vld [vmem:[%s6 + $0xc] sm:$0xf]
    %v448 = vld [vmem:[%s6 + $0x10] sm:$0xf]
    %v449 = vld [vmem:[%s6 + $0x14] sm:$0xf]
    %v450 = vld [vmem:[%s6 + $0x18] sm:$0xf]
    %v451 = vld [vmem:[%s6 + $0x1c] sm:$0xf]
    %v452 = vld [vmem:[%s6 + $0x20] sm:$0xf]
    %v453 = vld [vmem:[%s6 + $0x24] sm:$0xf]
    %v454 = vld [vmem:[%s6 + $0x28] sm:$0xf]
    %v455 = vld [vmem:[%s6 + $0x2c] sm:$0xf]
    %v456 = vld [vmem:[%s6 + $0x30] sm:$0xf]
    %v457 = vld [vmem:[%s6 + $0x34] sm:$0xf]
    %v458 = vld [vmem:[%s6 + $0x38] sm:$0xf]
    %v459 = vld [vmem:[%s6 + $0x3c] sm:$0xf]
    %v460 = vld [vmem:[%s6 + $0x40] sm:$0x1]
    %v461 = vunpack.c.l.bf16 %v460
    %v462 = vpack.c.bf16 %v441, %v440
    %v463 = vpack.c.bf16 %v443, %v442
    %v464 = vlaneseq
    %v465 = vshrl.u32 %v464, 7
    %v466 = vsub.s32 0, %v465
    %v467 = vrot.slane %v461, %v466
    %v484 = vunpack.c.l.b16 %v444
    %v485 = vunpack.c.l.b16 %v445
    %v486 = vunpack.c.l.b16 %v446
    %v487 = vunpack.c.l.b16 %v447
    %v488 = vunpack.c.l.b16 %v448
    %v489 = vunpack.c.l.b16 %v449
    %v490 = vunpack.c.l.b16 %v450
    %v491 = vunpack.c.l.b16 %v451
    %v492 = vunpack.c.l.b16 %v452
    %v493 = vunpack.c.l.b16 %v453
    %v494 = vunpack.c.l.b16 %v454
    %v495 = vunpack.c.l.b16 %v455
    %v496 = vunpack.c.l.b16 %v456
    %v497 = vunpack.c.l.b16 %v457
    %v498 = vunpack.c.l.b16 %v458
    %v499 = vunpack.c.l.b16 %v459
    %v500 = vpack.c.b16 %v485, %v484
    %v501 = vpack.c.b16 %v487, %v486
    %v502 = vpack.c.b16 %v489, %v488
    %v503 = vpack.c.b16 %v491, %v490
    %v504 = vpack.c.b16 %v493, %v492
    %v505 = vpack.c.b16 %v495, %v494
    %v506 = vpack.c.b16 %v497, %v496
    %v507 = vpack.c.b16 %v499, %v498
    %516 = vmatprep.subr.bf16.mxu0 0
    %517 = vmatpush1.bf16.msra.mxu0 %v500
    %518 = vmatprep.subr.bf16.mxu0 0
    %519 = vmatpush1.bf16.msra.mxu0 %v501
    %520 = vmatprep.subr.bf16.mxu0 0
    %521 = vmatpush1.bf16.msra.mxu0 %v502
    %522 = vmatprep.subr.bf16.mxu0 0
    %523 = vmatpush1.bf16.msra.mxu0 %v503
    %524 = vmatprep.subr.bf16.mxu0 0
    %525 = vmatpush1.bf16.msra.mxu0 %v504
    %526 = vmatprep.subr.bf16.mxu0 0
    %527 = vmatpush1.bf16.msra.mxu0 %v505
    %528 = vmatprep.subr.bf16.mxu0 0
    %529 = vmatpush1.bf16.msra.mxu0 %v506
    %530 = vmatprep.subr.bf16.mxu0 0
    %531 = vmatpush1.bf16.msra.mxu0 %v507
    %532 = vmatprep.subr.bf16.mxu0 0
    %533 = vmatpush1.bf16.msra.mxu0 0
    %534 = vmatprep.subr.bf16.mxu0 0
    %535 = vmatpush1.bf16.msra.mxu0 0
    %536 = vmatprep.subr.bf16.mxu0 0
    %537 = vmatpush1.bf16.msra.mxu0 0
    %538 = vmatprep.subr.bf16.mxu0 0
    %539 = vmatpush1.bf16.msra.mxu0 0
    %540 = vmatprep.subr.bf16.mxu0 0
    %541 = vmatpush1.bf16.msra.mxu0 0
    %542 = vmatprep.subr.bf16.mxu0 0
    %543 = vmatpush1.bf16.msra.mxu0 0
    %544 = vmatprep.subr.bf16.mxu0 0
    %545 = vmatpush1.bf16.msra.mxu0 0
    %546 = vmatprep.subr.bf16.mxu0 0
    %547 = vmatpush1.bf16.msra.mxu0 0
    %548 = vmatprep.mubr.bf16.mxu0 0
    %549 = vmatmul.mubr.bf16.gmra.mrb[0].mxu0 %v462
    %v550 = vpop.f32.mrb[0].mxu0
    %v551 = vadd.f32 %v467, %v550
    %v552 = vpop.f32.mrb[0].mxu0
    %v553 = vpop.f32.mrb[0].mxu0
    %v554 = vadd.f32 %v467, %v553
    %v555 = vpop.f32.mrb[0].mxu0
    %556 = vmatprep.mubr.bf16.mxu0 0
    %557 = vmatmul.mubr.bf16.gmra.mrb[0].mxu0 %v463
    %v558 = vpop.f32.mrb[0].mxu0
    %v559 = vadd.f32 %v467, %v558
    %v560 = vpop.f32.mrb[0].mxu0
    %v561 = vpop.f32.mrb[0].mxu0
    %v562 = vadd.f32 %v467, %v561
    %v563 = vpop.f32.mrb[0].mxu0
    %564 = vdwg.mxu0
    %565 = vst [vmem:[%s9] sm:$0xff] %v551
    %566 = vst [vmem:[%s9 + $0x8] sm:$0xff] %v554
    %567 = vst [vmem:[%s9 + $0x10] sm:$0xff] %v559
    %568 = vst [vmem:[%s9 + $0x18] sm:$0xff] %v562
    %v569 = vpack.c.bf16 %v554, %v551
    %v570 = vpack.c.bf16 %v562, %v559
    %571 = vxpose.xlu0.c.b16.start [1/8] %v104, 128
    %572 = vxpose.xlu0.c.b16.cont [2/8] %v105, 128
    %573 = vxpose.xlu0.c.b16.cont [3/8] 0, 128
    %574 = vxpose.xlu0.c.b16.cont [4/8] 0, 128
    %575 = vxpose.xlu0.c.b16.cont [5/8] 0, 128
    %576 = vxpose.xlu0.c.b16.cont [6/8] 0, 128
    %577 = vxpose.xlu0.c.b16.cont [7/8] 0, 128
    %578 = vxpose.xlu0.c.b16.end [8/8] 0, 128
    %v579 = vpop.trf.xlu0
    %v580 = vpop.trf.xlu0
    %v581 = vpop.trf.xlu0
    %v582 = vpop.trf.xlu0
    %v583 = vpop.trf.xlu0
    %v584 = vpop.trf.xlu0
    %v585 = vpop.trf.xlu0
    %v586 = vpop.trf.xlu0
    %vm587 = vcmask 261120
    %v589 = vsel %vm587, %v579, 0
    %591 = vmatprep.subr.bf16.mxu0 0
    %592 = vmatpush1.bf16.msra.mxu0 %v569
    %593 = vmatprep.subr.bf16.mxu0 0
    %594 = vmatpush1.bf16.msra.mxu0 %v570
    %595 = vmatprep.subr.bf16.mxu0 0
    %596 = vmatpush1.bf16.msra.mxu0 0
    %597 = vmatprep.subr.bf16.mxu0 0
    %598 = vmatpush1.bf16.msra.mxu0 0
    %599 = vmatprep.subr.bf16.mxu0 0
    %600 = vmatpush1.bf16.msra.mxu0 0
    %601 = vmatprep.subr.bf16.mxu0 0
    %602 = vmatpush1.bf16.msra.mxu0 0
    %603 = vmatprep.subr.bf16.mxu0 0
    %604 = vmatpush1.bf16.msra.mxu0 0
    %605 = vmatprep.subr.bf16.mxu0 0
    %606 = vmatpush1.bf16.msra.mxu0 0
    %607 = vmatprep.subr.bf16.mxu0 0
    %608 = vmatpush1.bf16.msra.mxu0 0
    %609 = vmatprep.subr.bf16.mxu0 0
    %610 = vmatpush1.bf16.msra.mxu0 0
    %611 = vmatprep.subr.bf16.mxu0 0
    %612 = vmatpush1.bf16.msra.mxu0 0
    %613 = vmatprep.subr.bf16.mxu0 0
    %614 = vmatpush1.bf16.msra.mxu0 0
    %615 = vmatprep.subr.bf16.mxu0 0
    %616 = vmatpush1.bf16.msra.mxu0 0
    %617 = vmatprep.subr.bf16.mxu0 0
    %618 = vmatpush1.bf16.msra.mxu0 0
    %619 = vmatprep.subr.bf16.mxu0 0
    %620 = vmatpush1.bf16.msra.mxu0 0
    %621 = vmatprep.subr.bf16.mxu0 0
    %622 = vmatpush1.bf16.msra.mxu0 0
    %623 = vmatprep.mubr.bf16.mxu0 0
    %624 = vmatmul.mubr.bf16.gmra.mrb[0].mxu0 %v589
    %v625 = vpop.f32.mrb[0].mxu0
    %v626 = vadd.f32 0.0, %v625
    %v627 = vpop.f32.mrb[0].mxu0
    %v628 = vpop.f32.mrb[0].mxu0
    %v629 = vadd.f32 0.0, %v628
    %v630 = vpop.f32.mrb[0].mxu0
    %631 = vdwg.mxu0
    %v632 = vld [vmem:[%s7] sm:$0xf]
    %v633 = vld [vmem:[%s7 + $0x4] sm:$0xf]
    %v634 = vld [vmem:[%s7 + $0x8] sm:$0xf]
    %v635 = vld [vmem:[%s7 + $0xc] sm:$0xf]
    %v636 = vld [vmem:[%s7 + $0x10] sm:$0xf]
    %v637 = vld [vmem:[%s7 + $0x14] sm:$0xf]
    %v638 = vld [vmem:[%s7 + $0x18] sm:$0xf]
    %v639 = vld [vmem:[%s7 + $0x1c] sm:$0xf]
    %v640 = vld [vmem:[%s7 + $0x20] sm:$0xf]
    %v641 = vld [vmem:[%s7 + $0x24] sm:$0xf]
    %v642 = vld [vmem:[%s7 + $0x28] sm:$0xf]
    %v643 = vld [vmem:[%s7 + $0x2c] sm:$0xf]
    %v644 = vld [vmem:[%s7 + $0x30] sm:$0xf]
    %v645 = vld [vmem:[%s7 + $0x34] sm:$0xf]
    %v646 = vld [vmem:[%s7 + $0x38] sm:$0xf]
    %v647 = vld [vmem:[%s7 + $0x3c] sm:$0xf]
    %v648 = vld [vmem:[%s7 + $0x40] sm:$0xf]
    %v649 = vld [vmem:[%s7 + $0x44] sm:$0xf]
    %v650 = vld [vmem:[%s7 + $0x48] sm:$0xf]
    %v651 = vld [vmem:[%s7 + $0x4c] sm:$0x1]
    %v652 = vunpack.c.l.bf16 %v651
    %v653 = vpack.c.bf16 %v629, %v626
    %v670 = vunpack.c.l.b16 %v634
    %v671 = vunpack.c.l.b16 %v635
    %v672 = vunpack.c.l.b16 %v636
    %v673 = vunpack.c.l.b16 %v637
    %v674 = vunpack.c.l.b16 %v638
    %v675 = vunpack.c.l.b16 %v639
    %v676 = vunpack.c.l.b16 %v640
    %v677 = vunpack.c.l.b16 %v641
    %v678 = vunpack.c.l.b16 %v642
    %v679 = vunpack.c.l.b16 %v643
    %v680 = vunpack.c.l.b16 %v644
    %v681 = vunpack.c.l.b16 %v645
    %v682 = vunpack.c.l.b16 %v646
    %v683 = vunpack.c.l.b16 %v647
    %v684 = vunpack.c.l.b16 %v648
    %v685 = vunpack.c.l.b16 %v649
    %v686 = vpack.c.b16 %v671, %v670
    %v687 = vpack.c.b16 %v673, %v672
    %v688 = vpack.c.b16 %v675, %v674
    %v689 = vpack.c.b16 %v677, %v676
    %v690 = vpack.c.b16 %v679, %v678
    %v691 = vpack.c.b16 %v681, %v680
    %v692 = vpack.c.b16 %v683, %v682
    %v693 = vpack.c.b16 %v685, %v684
    %702 = vmatprep.subr.bf16.mxu0 0
    %703 = vmatpush1.bf16.msra.mxu0 %v686
    %704 = vmatprep.subr.bf16.mxu0 0
    %705 = vmatpush1.bf16.msra.mxu0 %v687
    %706 = vmatprep.subr.bf16.mxu0 0
    %707 = vmatpush1.bf16.msra.mxu0 %v688
    %708 = vmatprep.subr.bf16.mxu0 0
    %709 = vmatpush1.bf16.msra.mxu0 %v689
    %710 = vmatprep.subr.bf16.mxu0 0
    %711 = vmatpush1.bf16.msra.mxu0 %v690
    %712 = vmatprep.subr.bf16.mxu0 0
    %713 = vmatpush1.bf16.msra.mxu0 %v691
    %714 = vmatprep.subr.bf16.mxu0 0
    %715 = vmatpush1.bf16.msra.mxu0 %v692
    %716 = vmatprep.subr.bf16.mxu0 0
    %717 = vmatpush1.bf16.msra.mxu0 %v693
    %718 = vmatprep.subr.bf16.mxu0 0
    %719 = vmatpush1.bf16.msra.mxu0 0
    %720 = vmatprep.subr.bf16.mxu0 0
    %721 = vmatpush1.bf16.msra.mxu0 0
    %722 = vmatprep.subr.bf16.mxu0 0
    %723 = vmatpush1.bf16.msra.mxu0 0
    %724 = vmatprep.subr.bf16.mxu0 0
    %725 = vmatpush1.bf16.msra.mxu0 0
    %726 = vmatprep.subr.bf16.mxu0 0
    %727 = vmatpush1.bf16.msra.mxu0 0
    %728 = vmatprep.subr.bf16.mxu0 0
    %729 = vmatpush1.bf16.msra.mxu0 0
    %730 = vmatprep.subr.bf16.mxu0 0
    %731 = vmatpush1.bf16.msra.mxu0 0
    %732 = vmatprep.subr.bf16.mxu0 0
    %733 = vmatpush1.bf16.msra.mxu0 0
    %734 = vmatprep.mubr.bf16.mxu0 0
    %735 = vmatmul.mubr.bf16.gmra.mrb[0].mxu0 %v653
    %v736 = vpop.f32.mrb[0].mxu0
    %v737 = vadd.f32 0.0, %v736
    %v738 = vpop.f32.mrb[0].mxu0
    %v739 = vpop.f32.mrb[0].mxu0
    %v740 = vadd.f32 0.0, %v739
    %v741 = vpop.f32.mrb[0].mxu0
    %742 = vdwg.mxu0
    %v745 = vunpack.c.l.b16 %v632
    %v746 = vunpack.c.l.b16 %v633
    %v747 = vpack.c.b16 %v746, %v745
    %v750 = vsel %vm112, %v110, 0
    %752 = vmatprep.subr.bf16.mxu0 0
    %753 = vmatpush1.bf16.msra.mxu0 %v747
    %754 = vmatprep.subr.bf16.mxu0 0
    %755 = vmatpush1.bf16.msra.mxu0 0
    %756 = vmatprep.subr.bf16.mxu0 0
    %757 = vmatpush1.bf16.msra.mxu0 0
    %758 = vmatprep.subr.bf16.mxu0 0
    %759 = vmatpush1.bf16.msra.mxu0 0
    %760 = vmatprep.subr.bf16.mxu0 0
    %761 = vmatpush1.bf16.msra.mxu0 0
    %762 = vmatprep.subr.bf16.mxu0 0
    %763 = vmatpush1.bf16.msra.mxu0 0
    %764 = vmatprep.subr.bf16.mxu0 0
    %765 = vmatpush1.bf16.msra.mxu0 0
    %766 = vmatprep.subr.bf16.mxu0 0
    %767 = vmatpush1.bf16.msra.mxu0 0
    %768 = vmatprep.subr.bf16.mxu0 0
    %769 = vmatpush1.bf16.msra.mxu0 0
    %770 = vmatprep.subr.bf16.mxu0 0
    %771 = vmatpush1.bf16.msra.mxu0 0
    %772 = vmatprep.subr.bf16.mxu0 0
    %773 = vmatpush1.bf16.msra.mxu0 0
    %774 = vmatprep.subr.bf16.mxu0 0
    %775 = vmatpush1.bf16.msra.mxu0 0
    %776 = vmatprep.subr.bf16.mxu0 0
    %777 = vmatpush1.bf16.msra.mxu0 0
    %778 = vmatprep.subr.bf16.mxu0 0
    %779 = vmatpush1.bf16.msra.mxu0 0
    %780 = vmatprep.subr.bf16.mxu0 0
    %781 = vmatpush1.bf16.msra.mxu0 0
    %782 = vmatprep.subr.bf16.mxu0 0
    %783 = vmatpush1.bf16.msra.mxu0 0
    %784 = vmatprep.mubr.bf16.mxu0 0
    %785 = vmatmul.mubr.bf16.gmra.mrb[0].mxu0 %v750
    %v786 = vpop.f32.mrb[0].mxu0
    %v787 = vadd.f32 %v737, %v786
    %v788 = vpop.f32.mrb[0].mxu0
    %v789 = vpop.f32.mrb[0].mxu0
    %v790 = vadd.f32 %v740, %v789
    %v791 = vpop.f32.mrb[0].mxu0
    %792 = vdwg.mxu0
    %v795 = vunpack.c.l.b16 %v42
    %v796 = vunpack.c.l.b16 %v43
    %v797 = vpack.c.b16 %v796, %v795
    %vm798 = vcmask 64512
    %v800 = vsel %vm798, %v797, 0
    %vm802 = vcmask 1043456
    %v804 = vsel %vm802, %v650, 0
    %806 = vmatprep.subr.bf16.mxu0 0
    %807 = vmatpush1.bf16.msra.mxu0 %v804
    %808 = vmatprep.subr.bf16.mxu0 0
    %809 = vmatpush1.bf16.msra.mxu0 0
    %810 = vmatprep.subr.bf16.mxu0 0
    %811 = vmatpush1.bf16.msra.mxu0 0
    %812 = vmatprep.subr.bf16.mxu0 0
    %813 = vmatpush1.bf16.msra.mxu0 0
    %814 = vmatprep.subr.bf16.mxu0 0
    %815 = vmatpush1.bf16.msra.mxu0 0
    %816 = vmatprep.subr.bf16.mxu0 0
    %817 = vmatpush1.bf16.msra.mxu0 0
    %818 = vmatprep.subr.bf16.mxu0 0
    %819 = vmatpush1.bf16.msra.mxu0 0
    %820 = vmatprep.subr.bf16.mxu0 0
    %821 = vmatpush1.bf16.msra.mxu0 0
    %822 = vmatprep.subr.bf16.mxu0 0
    %823 = vmatpush1.bf16.msra.mxu0 0
    %824 = vmatprep.subr.bf16.mxu0 0
    %825 = vmatpush1.bf16.msra.mxu0 0
    %826 = vmatprep.subr.bf16.mxu0 0
    %827 = vmatpush1.bf16.msra.mxu0 0
    %828 = vmatprep.subr.bf16.mxu0 0
    %829 = vmatpush1.bf16.msra.mxu0 0
    %830 = vmatprep.subr.bf16.mxu0 0
    %831 = vmatpush1.bf16.msra.mxu0 0
    %832 = vmatprep.subr.bf16.mxu0 0
    %833 = vmatpush1.bf16.msra.mxu0 0
    %834 = vmatprep.subr.bf16.mxu0 0
    %835 = vmatpush1.bf16.msra.mxu0 0
    %836 = vmatprep.subr.bf16.mxu0 0
    %837 = vmatpush1.bf16.msra.mxu0 0
    %838 = vmatprep.mubr.bf16.mxu0 0
    %839 = vmatmul.mubr.bf16.gmra.mrb[0].mxu0 %v800
    %v840 = vpop.f32.mrb[0].mxu0
    %v841 = vadd.f32 0.0, %v840
    %v842 = vpop.f32.mrb[0].mxu0
    %v843 = vpop.f32.mrb[0].mxu0
    %v844 = vadd.f32 0.0, %v843
    %v845 = vpop.f32.mrb[0].mxu0
    %846 = vdwg.mxu0
    %v847 = vadd.f32 %v787, %v841
    %v848 = vadd.f32 %v790, %v844
    %v849 = vlaneseq
    %v850 = vshrl.u32 %v849, 7
    %v851 = vsub.s32 0, %v850
    %v852 = vrot.slane %v652, %v851
    %v853 = vadd.f32 %v847, %v852
    %v854 = vadd.f32 %v848, %v852
    %v855 = vmax.f32 %v853, 0.0
    %v856 = vmax.f32 %v854, 0.0
    %v857 = vld [vmem:[%s8] sm:$0xf]
    %v858 = vld [vmem:[%s8 + $0x4] sm:$0xf]
    %v859 = vld [vmem:[%s8 + $0x8] sm:$0xf]
    %v860 = vld [vmem:[%s8 + $0xc] sm:$0xf]
    %v861 = vld [vmem:[%s8 + $0x10] sm:$0xf]
    %v862 = vld [vmem:[%s8 + $0x14] sm:$0xf]
    %v863 = vld [vmem:[%s8 + $0x18] sm:$0xf]
    %v864 = vld [vmem:[%s8 + $0x1c] sm:$0xf]
    %v865 = vld [vmem:[%s8 + $0x20] sm:$0xf]
    %v866 = vld [vmem:[%s8 + $0x24] sm:$0xf]
    %v867 = vld [vmem:[%s8 + $0x28] sm:$0xf]
    %v868 = vld [vmem:[%s8 + $0x2c] sm:$0xf]
    %v869 = vld [vmem:[%s8 + $0x30] sm:$0xf]
    %v870 = vld [vmem:[%s8 + $0x34] sm:$0xf]
    %v871 = vld [vmem:[%s8 + $0x38] sm:$0xf]
    %v872 = vld [vmem:[%s8 + $0x3c] sm:$0xf]
    %v873 = vld [vmem:[%s8 + $0x40] sm:$0x1]
    %v874 = vunpack.c.l.bf16 %v873
    %v875 = vpack.c.bf16 %v856, %v855
    %v876 = vlaneseq
    %v877 = vshrl.u32 %v876, 7
    %v878 = vsub.s32 0, %v877
    %v879 = vrot.slane %v874, %v878
    %v896 = vunpack.c.l.b16 %v857
    %v897 = vunpack.c.l.b16 %v858
    %v898 = vunpack.c.l.b16 %v859
    %v899 = vunpack.c.l.b16 %v860
    %v900 = vunpack.c.l.b16 %v861
    %v901 = vunpack.c.l.b16 %v862
    %v902 = vunpack.c.l.b16 %v863
    %v903 = vunpack.c.l.b16 %v864
    %v904 = vunpack.c.l.b16 %v865
    %v905 = vunpack.c.l.b16 %v866
    %v906 = vunpack.c.l.b16 %v867
    %v907 = vunpack.c.l.b16 %v868
    %v908 = vunpack.c.l.b16 %v869
    %v909 = vunpack.c.l.b16 %v870
    %v910 = vunpack.c.l.b16 %v871
    %v911 = vunpack.c.l.b16 %v872
    %v912 = vpack.c.b16 %v897, %v896
    %v913 = vpack.c.b16 %v899, %v898
    %v914 = vpack.c.b16 %v901, %v900
    %v915 = vpack.c.b16 %v903, %v902
    %v916 = vpack.c.b16 %v905, %v904
    %v917 = vpack.c.b16 %v907, %v906
    %v918 = vpack.c.b16 %v909, %v908
    %v919 = vpack.c.b16 %v911, %v910
    %928 = vmatprep.subr.bf16.mxu0 0
    %929 = vmatpush1.bf16.msra.mxu0 %v912
    %930 = vmatprep.subr.bf16.mxu0 0
    %931 = vmatpush1.bf16.msra.mxu0 %v913
    %932 = vmatprep.subr.bf16.mxu0 0
    %933 = vmatpush1.bf16.msra.mxu0 %v914
    %934 = vmatprep.subr.bf16.mxu0 0
    %935 = vmatpush1.bf16.msra.mxu0 %v915
    %936 = vmatprep.subr.bf16.mxu0 0
    %937 = vmatpush1.bf16.msra.mxu0 %v916
    %938 = vmatprep.subr.bf16.mxu0 0
    %939 = vmatpush1.bf16.msra.mxu0 %v917
    %940 = vmatprep.subr.bf16.mxu0 0
    %941 = vmatpush1.bf16.msra.mxu0 %v918
    %942 = vmatprep.subr.bf16.mxu0 0
    %943 = vmatpush1.bf16.msra.mxu0 %v919
    %944 = vmatprep.subr.bf16.mxu0 0
    %945 = vmatpush1.bf16.msra.mxu0 0
    %946 = vmatprep.subr.bf16.mxu0 0
    %947 = vmatpush1.bf16.msra.mxu0 0
    %948 = vmatprep.subr.bf16.mxu0 0
    %949 = vmatpush1.bf16.msra.mxu0 0
    %950 = vmatprep.subr.bf16.mxu0 0
    %951 = vmatpush1.bf16.msra.mxu0 0
    %952 = vmatprep.subr.bf16.mxu0 0
    %953 = vmatpush1.bf16.msra.mxu0 0
    %954 = vmatprep.subr.bf16.mxu0 0
    %955 = vmatpush1.bf16.msra.mxu0 0
    %956 = vmatprep.subr.bf16.mxu0 0
    %957 = vmatpush1.bf16.msra.mxu0 0
    %958 = vmatprep.subr.bf16.mxu0 0
    %959 = vmatpush1.bf16.msra.mxu0 0
    %960 = vmatprep.mubr.bf16.mxu0 0
    %961 = vmatmul.mubr.bf16.gmra.mrb[0].mxu0 %v875
    %v962 = vpop.f32.mrb[0].mxu0
    %v963 = vadd.f32 %v879, %v962
    %v964 = vpop.f32.mrb[0].mxu0
    %v965 = vpop.f32.mrb[0].mxu0
    %v966 = vadd.f32 %v879, %v965
    %v967 = vpop.f32.mrb[0].mxu0
    %968 = vdwg.mxu0
    %969 = vst [vmem:[#allocation2] sm:$0xff] %v963
    %970 = vst [vmem:[#allocation2 + $0x8] sm:$0xff] %v966
    // Predicated region
    $region38: #{meta_layer.1} parent=1 // pred_check
      _
    $region39: #{meta_layer.1} parent=1 // pred_check_branch
      %972 = sbr.rel (0) target = $region41
    $region40: #{meta_layer.1} parent=1 // pred_region
      _
    $region41: #{meta_layer.1} parent=1 // pred_fallthru
      _
    // Predicated region
    $region42: #{meta_layer.1} parent=1 // pred_check
      _
    $region43: #{meta_layer.1} parent=1 // pred_check_branch
      %974 = sbr.rel (0) target = $region45
    $region44: #{meta_layer.1} parent=1 // pred_region
      %s976 = ssub.s32 256, 256
      %977 = vsyncadd [#allocation3], %s976
      %s978 = sshll.u32 [#allocation2], 4
      %s979 = int_to_ptr.vmem [resolvable:$true] %s978
      %984 = dma.vmem_to_hbm [thread:$0]  %s979, 256, %s10, [#allocation3], 128, 128, 8
    $region45: #{meta_layer.1} parent=1 // pred_fallthru
      _
    // Predicated region
    $region46: #{meta_layer.1} parent=1 // pred_check
      _
    $region47: #{meta_layer.1} parent=1 // pred_check_branch
      %986 = sbr.rel (0) target = $region49
    $region48: #{meta_layer.1} parent=1 // pred_region
      _
    $region49: #{meta_layer.1} parent=1 // pred_fallthru
      _
    // Predicated region
    $region50: #{meta_layer.1} parent=1 // pred_check
      _
    $region51: #{meta_layer.1} parent=1 // pred_check_branch
      %988 = sbr.rel (0) target = $region53
    $region52: #{meta_layer.1} parent=1 // pred_region
      %989 = dma.done [#allocation3], 256
    $region53: #{meta_layer.1} parent=1 // pred_fallthru
      _
    %990 = vsyncpa [#allocation3], 1

</llo_original>
